<compile_context>
chip_gen: v7x
topology: tpu7x:2x2x1
jax: 0.10.0
libtpu: 0.0.40
codegen_flags: <defaults>
</compile_context>

<pallas_src>
import math

import jax
import jax.numpy as jnp
from jax.experimental import pallas as pl
from jax.experimental.pallas import tpu as pltpu


def _vmem_spec():
    return pl.BlockSpec(memory_space=pltpu.MemorySpace.VMEM)


def _layernorm(x, w, b, eps=1e-5):
    # f32 statistics (PyTorch LayerNorm, eps=1e-5).
    mu = jnp.mean(x, axis=-1, keepdims=True)
    var = jnp.mean((x - mu) ** 2, axis=-1, keepdims=True)
    return (x - mu) * jax.lax.rsqrt(var + eps) * w + b


# ----------------------- linear (patch embedding) kernel -----------------------
def linear_kernel(x_ref, w_ref, b_ref, o_ref):
    o_ref[...] = (
        jnp.dot(x_ref[...].astype(jnp.bfloat16), w_ref[...],
                preferred_element_type=jnp.float32)
        + b_ref[...]
    )


def linear_pallas(x, w_t, b, tm=256):
    # x: (M, K) f32, w_t: (K, N) bf16, b: (1, N) f32.
    # Rows (M) are tiled and streamed; the (K, N) weight stays resident in
    # VMEM (K = patch_dim and N = dim are small for ViT patch embedding; add
    # K/N tiling + an f32 accumulator if that ever stops holding).
    M, K = x.shape
    N = w_t.shape[1]
    tm = min(tm, M)
    return pl.pallas_call(
        linear_kernel,
        out_shape=jax.ShapeDtypeStruct((M, N), jnp.float32),
        grid_spec=pltpu.PrefetchScalarGridSpec(
            num_scalar_prefetch=0,
            grid=(pl.cdiv(M, tm),),
            in_specs=[pl.BlockSpec((tm, K), lambda i: (i, 0)),
                      pl.BlockSpec((K, N), lambda i: (0, 0)),
                      pl.BlockSpec((1, N), lambda i: (0, 0))],
            out_specs=pl.BlockSpec((tm, N), lambda i: (i, 0))),
        compiler_params=pltpu.CompilerParams(
            dimension_semantics=("parallel",)),
    )(x, w_t, b)


# ----------------------- fused transformer encoder stack kernel -----------------------
def make_encoder_stack_kernel(TL, B, E, H, F):
    hd = E // H
    M = TL * B  # flattened matmul rows per grid step

    def kernel(x_ref, wqkv_ref, wo_ref, w1_ref, w2_ref, sm_ref, o_ref):
        d = pl.program_id(1)

        # First layer of this L-tile: load the (TL, B, E) slab into the
        # resident output block, which doubles as the depth accumulator.
        @pl.when(d == 0)
        def _():
            o_ref[...] = x_ref[...]

        x = o_ref[...].reshape(M, E)              # (TL*B, E) f32 residual stream
        xb = x.astype(jnp.bfloat16)

        # Packed per-layer small params: one DMA per grid step.
        sm = sm_ref[...]                          # (1, 9E + F) f32
        o0 = 0
        bqkv = sm[:, o0:o0 + 3 * E]; o0 += 3 * E
        bo   = sm[:, o0:o0 + E];     o0 += E
        b1   = sm[:, o0:o0 + F];     o0 += F
        b2   = sm[:, o0:o0 + E];     o0 += E
        ln1w = sm[:, o0:o0 + E];     o0 += E
        ln1b = sm[:, o0:o0 + E];     o0 += E
        ln2w = sm[:, o0:o0 + E];     o0 += E
        ln2b = sm[:, o0:o0 + E]

        # Fused QKV projection: one lane-dense (E, 3E) matmul over TL*B rows.
        # (The 1/sqrt(hd) attention scale is already folded into the Q part.)
        qkv = (jnp.dot(xb, wqkv_ref[...], preferred_element_type=jnp.float32)
               + bqkv)                            # (TL*B, 3E) f32
        qkv_b = qkv.astype(jnp.bfloat16).reshape(TL, B, 3 * E)  # one cast

        wo = wo_ref[...]                          # (E, E) bf16, loaded once

        # Block-diagonal attention: per position t only a BxB block.  Per-head
        # outputs are folded straight into the output projection (wo split
        # along its K axis) and accumulated in f32 -- no attention scratch
        # slab, no sub-128-lane masked stores.
        attn = jnp.zeros((M, E), jnp.float32)
        for h in range(H):                        # static unroll, H small
            sl = slice(h * hd, (h + 1) * hd)
            qh = qkv_b[:, :, sl]                                  # (TL, B, hd)
            kh = qkv_b[:, :, E + h * hd:E + (h + 1) * hd]
            vh = qkv_b[:, :, 2 * E + h * hd:2 * E + (h + 1) * hd]
            s = jax.lax.dot_general(                              # (TL, B, B)
                qh, kh, (((2,), (2,)), ((0,), (0,))),
                preferred_element_type=jnp.float32)
            s = s - jnp.max(s, axis=-1, keepdims=True)
            p = jnp.exp(s)
            p = p * pl.reciprocal(jnp.sum(p, axis=-1, keepdims=True),
                                  approx=True)
            oh = jax.lax.dot_general(                             # (TL, B, hd)
                p.astype(jnp.bfloat16), vh, (((2,), (1,)), ((0,), (0,))),
                preferred_element_type=jnp.float32)
            attn = attn + jnp.dot(
                oh.reshape(M, hd).astype(jnp.bfloat16), wo[sl, :],
                preferred_element_type=jnp.float32)
        attn = attn + bo

        # PyTorch TransformerEncoderLayer default: post-norm (norm_first=False).
        x = _layernorm(x + attn, ln1w, ln1b)

        h1 = jnp.maximum(
            jnp.dot(x.astype(jnp.bfloat16), w1_ref[...],
                    preferred_element_type=jnp.float32) + b1, 0.0)
        h2 = (jnp.dot(h1.astype(jnp.bfloat16), w2_ref[...],
                      preferred_element_type=jnp.float32) + b2)
        x = _layernorm(x + h2, ln2w, ln2b)

        o_ref[...] = x.reshape(TL, B, E)

    return kernel


def encoder_stack_pallas(x3, params, heads, tl=None):
    # x3: (L, B, E) f32 -> (L, B, E) f32.
    # Grid = (L tiles "parallel", depth "arbitrary").  The activation tile
    # stays resident in the output block across depth while per-layer weights
    # are streamed (double-buffered) by BlockSpec.
    L, B, E = x3.shape
    depth = params["wqkv"].shape[0]
    F = params["w1"].shape[2]

    if tl is None:
        # Aim for >= 128 matmul rows per tile (use 256 on v6e/v7x if VMEM
        # allows); keep the number of L tiles even where possible so the
        # "parallel" axis load-balances across v7x's two TensorCores.
        tl = max(1, min(L, -(-128 // B)))
    num_tiles = -(-L // tl)
    Lp = num_tiles * tl
    if Lp != L:
        # Token positions are independent, so zero-padding L is harmless.
        x3 = jnp.concatenate(
            [x3, jnp.zeros((Lp - L, B, E), x3.dtype)], axis=0)

    kernel = make_encoder_stack_kernel(tl, B, E, heads, F)
    xmap = lambda i, d: (i, 0, 0)
    wmap = lambda i, d: (d, 0, 0)

    in_specs = [
        pl.BlockSpec((tl, B, E), xmap),               # activations
        pl.BlockSpec((None, E, 3 * E), wmap),         # wqkv  (bf16)
        pl.BlockSpec((None, E, E), wmap),             # wo    (bf16)
        pl.BlockSpec((None, E, F), wmap),             # w1    (bf16)
        pl.BlockSpec((None, F, E), wmap),             # w2    (bf16)
        pl.BlockSpec((None, 1, 9 * E + F), wmap),     # packed small params
    ]

    # Explicit scoped-VMEM budget: double-buffered weights + activation blocks
    # + headroom for f32 intermediates.  Never below 32 MiB so toy shapes keep
    # compiling; capped at 100 MiB (re-derive tl for v7x's 64 MiB if needed).
    weight_bytes = 2 * 2 * (3 * E * E + E * E + 2 * E * F)       # bf16, x2 buf
    small_bytes = 2 * 4 * (9 * E + F)
    act_bytes = 2 * 2 * 4 * tl * B * E                           # x + out blocks
    tmp_bytes = 3 * 4 * tl * B * (3 * E + F + 4 * E)             # intermediates
    vmem_limit = int(min(100 * 2 ** 20,
                         max(32 * 2 ** 20,
                             weight_bytes + small_bytes + act_bytes + tmp_bytes)))

    out = pl.pallas_call(
        kernel,
        out_shape=jax.ShapeDtypeStruct((Lp, B, E), jnp.float32),
        grid_spec=pltpu.PrefetchScalarGridSpec(
            num_scalar_prefetch=0,
            grid=(num_tiles, depth),
            in_specs=in_specs,
            out_specs=pl.BlockSpec((tl, B, E), xmap)),
        compiler_params=pltpu.CompilerParams(
            dimension_semantics=("parallel", "arbitrary"),
            vmem_limit_bytes=vmem_limit),
    )(x3, params["wqkv"], params["wo"], params["w1"], params["w2"],
      params["smalls"])
    return out[:L]


# ----------------------- mlp head kernel (LayerNorm + Linear) -----------------------
def head_kernel(x_ref, lnw_ref, lnb_ref, w_ref, b_ref, o_ref):
    xn = _layernorm(x_ref[...], lnw_ref[...], lnb_ref[...])
    o_ref[...] = (
        jnp.dot(xn.astype(jnp.bfloat16), w_ref[...],
                preferred_element_type=jnp.float32) + b_ref[...]
    )


def head_pallas(x, params):
    # Head weights are zero-padded to a 128-lane multiple so the output store
    # is lane-dense (unmasked vst); the wrapper slices back to num_classes.
    B, _ = x.shape
    Np = params["head_w_t"].shape[1]
    return pl.pallas_call(
        head_kernel,
        out_shape=jax.ShapeDtypeStruct((B, Np), jnp.float32),
        in_specs=[_vmem_spec()] * 5,
        out_specs=_vmem_spec(),
    )(x, params["head_lnw"], params["head_lnb"],
      params["head_w_t"], params["head_b"])


# ----------------------- parameter init (deterministic, synthetic) -----------------------
def init_params(key, patch_dim, dim, depth, heads, mlp_dim, num_classes,
                num_patches):
    def normal(k, shape, scale=0.02):
        return scale * jax.random.normal(k, shape, dtype=jnp.float32)

    keys = jax.random.split(key, 16)
    params = {
        "patch_w_t": normal(keys[0], (patch_dim, dim)).astype(jnp.bfloat16),
        "patch_b": normal(keys[1], (1, dim)),
        "cls_token": normal(keys[2], (1, 1, dim), 1.0),          # torch.randn
        "pos_embedding": normal(keys[3], (1, num_patches + 1, dim), 1.0),
        "head_lnw": jnp.ones((1, dim), jnp.float32),
        "head_lnb": jnp.zeros((1, dim), jnp.float32),
    }

    # Per-layer weights stacked along a leading depth axis; QKV fused to
    # (E, 3E).  Fold the 1/sqrt(head_dim) attention scale into the Q section
    # of the fused QKV weight/bias (zero runtime cost in the kernel).
    hd = dim // heads
    scale = 1.0 / math.sqrt(hd)
    wqkv = normal(keys[4], (depth, dim, 3 * dim))
    bqkv = normal(keys[5], (depth, 1, 3 * dim))
    wqkv = wqkv.at[:, :, :dim].multiply(scale)
    bqkv = bqkv.at[:, :, :dim].multiply(scale)
    params["wqkv"] = wqkv.astype(jnp.bfloat16)
    params["wo"] = normal(keys[6], (depth, dim, dim)).astype(jnp.bfloat16)
    params["w1"] = normal(keys[8], (depth, dim, mlp_dim)).astype(jnp.bfloat16)
    params["w2"] = normal(keys[10], (depth, mlp_dim, dim)).astype(jnp.bfloat16)

    bo = normal(keys[7], (depth, 1, dim))
    b1 = normal(keys[9], (depth, 1, mlp_dim))
    b2 = normal(keys[11], (depth, 1, dim))
    ln1w = jnp.ones((depth, 1, dim), jnp.float32)
    ln1b = jnp.zeros((depth, 1, dim), jnp.float32)
    ln2w = jnp.ones((depth, 1, dim), jnp.float32)
    ln2b = jnp.zeros((depth, 1, dim), jnp.float32)
    # Pack all small per-layer tensors -> one (depth, 1, 9E+F) array, one DMA
    # per grid step instead of nine tiny ones.
    params["smalls"] = jnp.concatenate(
        [bqkv, bo, b1, b2, ln1w, ln1b, ln2w, ln2b], axis=-1)

    # Classifier head, zero-padded to a lane-dense multiple of 128 columns.
    n_pad = ((num_classes + 127) // 128) * 128
    hw = normal(keys[12], (dim, num_classes))
    hb = normal(keys[13], (1, num_classes))
    params["head_w_t"] = (jnp.zeros((dim, n_pad), jnp.float32)
                          .at[:, :num_classes].set(hw)).astype(jnp.bfloat16)
    params["head_b"] = (jnp.zeros((1, n_pad), jnp.float32)
                        .at[:, :num_classes].set(hb))
    return params


# ----------------------- full forward pass -----------------------
def vit_forward(x, params, cfg, encode_all_positions=False, tl=None):
    B, C, Himg, Wimg = x.shape
    p = cfg["patch_size"]
    dim = cfg["dim"]
    nH, nW = Himg // p, Wimg // p
    num_patches = nH * nW
    patch_dim = p * p * 3

    # torch unfold(2,p,p).unfold(3,p,p).contiguous().view(B,-1,patch_dim) (glue)
    xp = x.reshape(B, C, nH, p, nW, p).transpose(0, 1, 2, 4, 3, 5)
    xp = xp.reshape(B, num_patches, patch_dim)

    # Patch embedding (Pallas matmul, bf16 MXU inputs, row-tiled grid).
    emb = linear_pallas(xp.reshape(B * num_patches, patch_dim),
                        params["patch_w_t"], params["patch_b"])
    emb = emb.reshape(B, num_patches, dim)

    cls = jnp.broadcast_to(params["cls_token"], (B, 1, dim))
    tok = jnp.concatenate([cls, emb], axis=1)            # (B, L, dim)
    tok = tok + params["pos_embedding"]                  # broadcast over B
    # TODO(synk): nn.Dropout treated as inference-mode identity.

    # batch_first=False PyTorch sees (S=B, N=L, E): attention mixes over B
    # independently per token position l -> process (L, B, E) with L tiled on
    # the grid and depth fused.
    x3 = jnp.transpose(tok, (1, 0, 2))                   # (L, B, dim)
    if not encode_all_positions:
        # Only transformer(x)[:, 0] (token position 0) feeds the classifier
        # head, and under this factorization its output depends only on its
        # own slab -> skip the dead (L-1)/L of the encoder work & writeback.
        x3 = x3[:1]
    y3 = encoder_stack_pallas(x3, params, cfg["heads"], tl=tl)

    cls_out = y3[0]                                      # == x[:, 0] in (B, L, E)
    logits = head_pallas(cls_out, params)
    return logits[:, :cfg["num_classes"]]


if __name__ == "__main__":
    cfg = dict(img_size=16, patch_size=8, num_classes=10,
               dim=32, depth=2, heads=4, mlp_dim=64)
    num_patches = (cfg["img_size"] // cfg["patch_size"]) ** 2
    patch_dim = cfg["patch_size"] ** 2 * 3

    key = jax.random.PRNGKey(0)
    kx, kp = jax.random.split(key)
    x = jax.random.normal(kx, (2, 3, cfg["img_size"], cfg["img_size"]),
                          dtype=jnp.float32)
    params = init_params(kp, patch_dim, cfg["dim"], cfg["depth"], cfg["heads"],
                         cfg["mlp_dim"], cfg["num_classes"], num_patches)

    # Fast path: encoder restricted to the only token position the head uses.
    out = jax.block_until_ready(vit_forward(x, params, cfg))
    assert out.shape == (2, cfg["num_classes"]), out.shape
    assert jnp.all(jnp.isfinite(out))

    # Cross-check against the general L-tiled path (all positions, tl=2 so the
    # multi-tile grid and the L padding are exercised).
    out_full = jax.block_until_ready(
        vit_forward(x, params, cfg, encode_all_positions=True, tl=2))
    assert out_full.shape == out.shape
    assert jnp.allclose(out, out_full, rtol=1e-3, atol=1e-3), (
        float(jnp.max(jnp.abs(out - out_full))))

    print("KERNEL_OK")
</pallas_src>

<mosaic_0001>
module attributes {stable_mosaic.version = 11 : i64} {
  func.func @linear_kernel(%arg0: i32, %arg1: memref<8x192xf32, #tpu.memory_space<vmem>>, %arg2: memref<192x32xbf16, #tpu.memory_space<vmem>>, %arg3: memref<1x32xf32, #tpu.memory_space<vmem>>, %arg4: memref<8x32xf32, #tpu.memory_space<vmem>>) attributes {dimension_semantics = [#tpu.dimension_semantics<parallel>], iteration_bounds = array<i64: 1>, scalar_prefetch = 0 : i64, scratch_operands = 0 : i64, tpu.core_type = #tpu.core_type<tc>, window_params = [{transform_indices = @transform_0, window_bounds = array<i64: 8, 192>}, {pipeline_mode = #tpu.pipeline_mode<synchronous>, transform_indices = @transform_1, window_bounds = array<i64: 192, 32>}, {pipeline_mode = #tpu.pipeline_mode<synchronous>, transform_indices = @transform_2, window_bounds = array<i64: 1, 32>}, {transform_indices = @transform_3, window_bounds = array<i64: 8, 32>}]} {
    %c0 = arith.constant 0 : index
    %c0_0 = arith.constant 0 : index
    %0 = vector.load %arg1[%c0, %c0_0] : memref<8x192xf32, #tpu.memory_space<vmem>>, vector<8x192xf32>
    %1 = arith.truncf %0 : vector<8x192xf32> to vector<8x192xbf16>
    %c0_1 = arith.constant 0 : index
    %c0_2 = arith.constant 0 : index
    %2 = vector.load %arg2[%c0_1, %c0_2] : memref<192x32xbf16, #tpu.memory_space<vmem>>, vector<192x32xbf16>
    %cst = arith.constant dense<0.000000e+00> : vector<8x32xf32>
    %3 = tpu.matmul %1, %2, %cst {dimension_numbers = #tpu.dot_dimension_numbers<[1], [0], [0], [1], [0, 0, 1, 1], [], []>} : vector<8x192xbf16>, vector<192x32xbf16>, vector<8x32xf32> -> vector<8x32xf32>
    %c0_3 = arith.constant 0 : index
    %c0_4 = arith.constant 0 : index
    %4 = vector.load %arg3[%c0_3, %c0_4] : memref<1x32xf32, #tpu.memory_space<vmem>>, vector<1x32xf32>
    %5 = vector.broadcast %4 : vector<1x32xf32> to vector<8x32xf32>
    %6 = arith.addf %3, %5 : vector<8x32xf32>
    %c0_5 = arith.constant 0 : index
    %c0_6 = arith.constant 0 : index
    %7 = vector.load %arg4[%c0_5, %c0_6] : memref<8x32xf32, #tpu.memory_space<vmem>>, vector<8x32xf32>
    tpu.vector_store %arg4[%c0_5, %c0_6], %6 {strides = array<i32>} : memref<8x32xf32, #tpu.memory_space<vmem>>, vector<8x32xf32>,
    return
  }
  func.func @transform_0(%arg0: i32) -> (i32, i32) {
    %c0_i32 = arith.constant 0 : i32
    %c0_i32_0 = arith.constant 0 : i32
    return %arg0, %c0_i32 : i32, i32
  }
  func.func @transform_1(%arg0: i32) -> (i32, i32) {
    %c0_i32 = arith.constant 0 : i32
    %c0_i32_0 = arith.constant 0 : i32
    %c0_i32_1 = arith.constant 0 : i32
    return %c0_i32, %c0_i32_0 : i32, i32
  }
  func.func @transform_2(%arg0: i32) -> (i32, i32) {
    %c0_i32 = arith.constant 0 : i32
    %c0_i32_0 = arith.constant 0 : i32
    %c0_i32_1 = arith.constant 0 : i32
    return %c0_i32, %c0_i32_0 : i32, i32
  }
  func.func @transform_3(%arg0: i32) -> (i32, i32) {
    %c0_i32 = arith.constant 0 : i32
    %c0_i32_0 = arith.constant 0 : i32
    return %arg0, %c0_i32 : i32, i32
  }
}

</mosaic_0001>

<llo_original>
// kernel: tpu_custom_call.1
$region0: #{tpu_custom_call.1}
  #allocation0 [shape = 'u32[]', space=smem, size = 0x4, offset = 0x4, fixed_abs, tag = 'smem constant byte address 0x4 - core index']
  #allocation1 [shape = 'u32[144,128]{1,0:T(1,128)}', space=vmem, size = 0x12000, scoped, tag = 'internal scratch']
  %s0 = inlined_call_operand.vmem [shape: f32[8,192], index: 0, kind: input, shape index: {}]
  %s1 = inlined_call_operand.vmem [shape: bf16[192,32], index: 1, kind: input, shape index: {}]
  %s2 = inlined_call_operand.vmem [shape: f32[1,32], index: 2, kind: input, shape index: {}]
  %s3 = inlined_call_operand.hbm [shape: f32[8,32], index: 3, kind: output, shape index: {}]
  %s4 = sld [smem:[#allocation0]]
  $region22: #{tpu_custom_call.1} parent=0
    _
  %s6 = ssub.s32 1, %s4
  %s7 = scalar_select 0, %s6, %s4
  $region1: #{tpu_custom_call.1} parent=0
    #allocation2 [shape = 'u8[4096]{0}', space=vmem, size = 0x1000, scoped, tag = 'output window, operand 0, single buffered']
    #allocation3 [shape = 's32[1]{0}', space=sflag, size = 0x4, scoped, tag = 'scoped memory for tpu_custom_call.1']
    %8 = vsyncpa [#allocation3], 0
    // Predicated region
    $region2: #{tpu_custom_call.1} parent=1 // pred_check
      _
    $region3: #{tpu_custom_call.1} parent=1 // pred_check_branch
      %10 = sbr.rel (0) target = $region5
    $region4: #{tpu_custom_call.1} parent=1 // pred_region
      _
    $region5: #{tpu_custom_call.1} parent=1 // pred_fallthru
      _
    // Predicated region
    $region6: #{tpu_custom_call.1} parent=1 // pred_check
      _
    $region7: #{tpu_custom_call.1} parent=1 // pred_check_branch
      %12 = sbr.rel (0) target = $region9
    $region8: #{tpu_custom_call.1} parent=1 // pred_region
      _
    $region9: #{tpu_custom_call.1} parent=1 // pred_fallthru
      _
    // Predicated region
    $region10: #{tpu_custom_call.1} parent=1 // pred_check
      _
    $region11: #{tpu_custom_call.1} parent=1 // pred_check_branch
      %14 = sbr.rel (0) target = $region13
    $region12: #{tpu_custom_call.1} parent=1 // pred_region
      _
    $region13: #{tpu_custom_call.1} parent=1 // pred_fallthru
      _
    %v16 = vld [vmem:[%s0] sm:$0xff]
    %v17 = vld [vmem:[%s0 + $0x8] sm:$0xff]
    %v18 = vpack.c.bf16 %v16, %v16
    %v19 = vpack.c.bf16 %v17, %v17
    %v20 = vld [vmem:[%s1] sm:$0xf]
    %v21 = vld [vmem:[%s1 + $0x4] sm:$0xf]
    %v22 = vld [vmem:[%s1 + $0x8] sm:$0xf]
    %v23 = vld [vmem:[%s1 + $0xc] sm:$0xf]
    %v24 = vld [vmem:[%s1 + $0x10] sm:$0xf]
    %v25 = vld [vmem:[%s1 + $0x14] sm:$0xf]
    %v26 = vld [vmem:[%s1 + $0x18] sm:$0xf]
    %v27 = vld [vmem:[%s1 + $0x1c] sm:$0xf]
    %v28 = vld [vmem:[%s1 + $0x20] sm:$0xf]
    %v29 = vld [vmem:[%s1 + $0x24] sm:$0xf]
    %v30 = vld [vmem:[%s1 + $0x28] sm:$0xf]
    %v31 = vld [vmem:[%s1 + $0x2c] sm:$0xf]
    %v32 = vld [vmem:[%s1 + $0x30] sm:$0xf]
    %v33 = vld [vmem:[%s1 + $0x34] sm:$0xf]
    %v34 = vld [vmem:[%s1 + $0x38] sm:$0xf]
    %v35 = vld [vmem:[%s1 + $0x3c] sm:$0xf]
    %v36 = vld [vmem:[%s1 + $0x40] sm:$0xf]
    %v37 = vld [vmem:[%s1 + $0x44] sm:$0xf]
    %v38 = vld [vmem:[%s1 + $0x48] sm:$0xf]
    %v39 = vld [vmem:[%s1 + $0x4c] sm:$0xf]
    %v40 = vld [vmem:[%s1 + $0x50] sm:$0xf]
    %v41 = vld [vmem:[%s1 + $0x54] sm:$0xf]
    %v42 = vld [vmem:[%s1 + $0x58] sm:$0xf]
    %v43 = vld [vmem:[%s1 + $0x5c] sm:$0xf]
    %v44 = vld [vmem:[%s2] sm:$0x1]
    %v46 = vlaneseq
    %v47 = vshrl.u32 %v46, 7
    %v48 = vsub.s32 0, %v47
    %v49 = vrot.slane %v44, %v48
    %v75 = vunpack.c.l.b16 %v20
    %v76 = vunpack.c.l.b16 %v21
    %v77 = vunpack.c.l.b16 %v22
    %v78 = vunpack.c.l.b16 %v23
    %v79 = vunpack.c.l.b16 %v24
    %v80 = vunpack.c.l.b16 %v25
    %v81 = vunpack.c.l.b16 %v26
    %v82 = vunpack.c.l.b16 %v27
    %v83 = vunpack.c.l.b16 %v28
    %v84 = vunpack.c.l.b16 %v29
    %v85 = vunpack.c.l.b16 %v30
    %v86 = vunpack.c.l.b16 %v31
    %v87 = vunpack.c.l.b16 %v32
    %v88 = vunpack.c.l.b16 %v33
    %v89 = vunpack.c.l.b16 %v34
    %v90 = vunpack.c.l.b16 %v35
    %v91 = vunpack.c.l.b16 %v36
    %v92 = vunpack.c.l.b16 %v37
    %v93 = vunpack.c.l.b16 %v38
    %v94 = vunpack.c.l.b16 %v39
    %v95 = vunpack.c.l.b16 %v40
    %v96 = vunpack.c.l.b16 %v41
    %v97 = vunpack.c.l.b16 %v42
    %v98 = vunpack.c.l.b16 %v43
    %v99 = vpack.c.b16 %v76, %v75
    %v100 = vpack.c.b16 %v78, %v77
    %v101 = vpack.c.b16 %v80, %v79
    %v102 = vpack.c.b16 %v82, %v81
    %v103 = vpack.c.b16 %v84, %v83
    %v104 = vpack.c.b16 %v86, %v85
    %v105 = vpack.c.b16 %v88, %v87
    %v106 = vpack.c.b16 %v90, %v89
    %v107 = vpack.c.b16 %v92, %v91
    %v108 = vpack.c.b16 %v94, %v93
    %v109 = vpack.c.b16 %v96, %v95
    %v110 = vpack.c.b16 %v98, %v97
    %vm123 = vcmask 523264
    %v125 = vsel %vm123, %v19, 0
    %127 = vmatprep.subr.bf16.mxu0 0
    %128 = vmatpush1.bf16.msra.mxu0 %v99
    %129 = vmatprep.subr.bf16.mxu0 0
    %130 = vmatpush1.bf16.msra.mxu0 %v100
    %131 = vmatprep.subr.bf16.mxu0 0
    %132 = vmatpush1.bf16.msra.mxu0 %v101
    %133 = vmatprep.subr.bf16.mxu0 0
    %134 = vmatpush1.bf16.msra.mxu0 %v102
    %135 = vmatprep.subr.bf16.mxu0 0
    %136 = vmatpush1.bf16.msra.mxu0 %v103
    %137 = vmatprep.subr.bf16.mxu0 0
    %138 = vmatpush1.bf16.msra.mxu0 %v104
    %139 = vmatprep.subr.bf16.mxu0 0
    %140 = vmatpush1.bf16.msra.mxu0 %v105
    %141 = vmatprep.subr.bf16.mxu0 0
    %142 = vmatpush1.bf16.msra.mxu0 %v106
    %143 = vmatprep.subr.bf16.mxu0 0
    %144 = vmatpush1.bf16.msra.mxu0 %v107
    %145 = vmatprep.subr.bf16.mxu0 0
    %146 = vmatpush1.bf16.msra.mxu0 %v108
    %147 = vmatprep.subr.bf16.mxu0 0
    %148 = vmatpush1.bf16.msra.mxu0 %v109
    %149 = vmatprep.subr.bf16.mxu0 0
    %150 = vmatpush1.bf16.msra.mxu0 %v110
    %151 = vmatprep.subr.bf16.mxu0 0
    %152 = vmatpush1.bf16.msra.mxu0 0
    %153 = vmatprep.subr.bf16.mxu0 0
    %154 = vmatpush1.bf16.msra.mxu0 0
    %155 = vmatprep.subr.bf16.mxu0 0
    %156 = vmatpush1.bf16.msra.mxu0 0
    %157 = vmatprep.subr.bf16.mxu0 0
    %158 = vmatpush1.bf16.msra.mxu0 0
    %159 = vmatprep.mubr.bf16.mxu0 %v125
    %160 = vmatmul.mubr.bf16.gmra.mrb[0].mxu0 %v18
    %v161 = vpop.f32.mrb[0].mxu0
    %v162 = vadd.f32 %v49, %v161
    %v163 = vpop.f32.mrb[0].mxu0
    %v164 = vpop.f32.mrb[0].mxu0
    %v165 = vpop.f32.mrb[0].mxu0
    %166 = vdwg.mxu0
    %vm167 = vcmask 261120
    %168 = vst.msk [vmem:[#allocation2] sm:$0xff] %vm167, %v162
    // Predicated region
    $region14: #{tpu_custom_call.1} parent=1 // pred_check
      _
    $region15: #{tpu_custom_call.1} parent=1 // pred_check_branch
      %170 = sbr.rel (0) target = $region17
    $region16: #{tpu_custom_call.1} parent=1 // pred_region
      %s172 = ssub.s32 128, 128
      %173 = vsyncadd [#allocation3], %s172
      %s175 = sshll.u32 [#allocation2], 4
      %s176 = int_to_ptr.vmem [resolvable:$true] %s175
      %178 = dma.vmem_to_hbm [thread:$0]  %s176, 128, %s3, [#allocation3]
    $region17: #{tpu_custom_call.1} parent=1 // pred_fallthru
      _
    // Predicated region
    $region18: #{tpu_custom_call.1} parent=1 // pred_check
      _
    $region19: #{tpu_custom_call.1} parent=1 // pred_check_branch
      %180 = sbr.rel (0) target = $region21
    $region20: #{tpu_custom_call.1} parent=1 // pred_region
      %181 = dma.done [#allocation3], 128
    $region21: #{tpu_custom_call.1} parent=1 // pred_fallthru
      _
    %182 = vsyncpa [#allocation3], 1

</llo_original>
